<compile_context>
chip_gen: v7x
topology: tpu7x:2x2x1
jax: 0.10.0
libtpu: 0.0.40
codegen_flags: <defaults>
</compile_context>

<pallas_src>
import jax
import jax.numpy as jnp
from jax.experimental import pallas as pl
from jax.experimental.pallas import tpu as pltpu

SMOOTH = 1e-3  # matches the module's default smooth=0.001


def _pick_block_hw(hw: int, cap: int = 64 * 1024) -> int:
    """Largest lane-aligned (multiple of 128) divisor of hw that is <= cap.

    Falls back to the full extent (always legal for BlockSpec) if no such
    divisor exists or hw already fits under the cap.
    """
    if hw <= cap:
        return hw
    b = cap - (cap % 128)
    while b >= 128:
        if hw % b == 0:
            return b
        b -= 128
    return hw


def _dice_kernel(x_ref, t_ref, dice_ref, inter_acc, sin_acc, stg_acc):
    """Grid = (n, k): sample n, spatial tile k (reduction axis, last).

    x_ref    : (C, BHW) float32  -- inputs[n, :, k-th spatial tile]
    t_ref    : (1, BHW) int32    -- targets[n, k-th spatial tile]
    dice_ref : (1, C, 1) float32 -- per-(n, c) dice, written on last k step
    *_acc    : (C, 1) float32 VMEM accumulators, persist across k
    """
    k = pl.program_id(1)

    @pl.when(k == 0)
    def _():
        inter_acc[...] = jnp.zeros_like(inter_acc)
        sin_acc[...] = jnp.zeros_like(sin_acc)
        stg_acc[...] = jnp.zeros_like(stg_acc)

    x = x_ref[...]                                           # (C, BHW) f32
    t = t_ref[...].astype(jnp.int32)                         # (1, BHW)
    C, BHW = x.shape

    # One-hot for all channels with a single sublane-iota compare
    # (the scatter_(dim=1, ..., value=1) of the PyTorch code).
    cls = jax.lax.broadcasted_iota(jnp.int32, (C, BHW), 0)   # (C, BHW)
    onehot = (t == cls).astype(jnp.float32)                  # (C, BHW)

    # VPU multiply + XLU cross-lane reduce, accumulated across spatial tiles.
    inter_acc[...] += jnp.sum(x * onehot, axis=-1, keepdims=True)  # (C, 1)
    sin_acc[...] += jnp.sum(x, axis=-1, keepdims=True)             # (C, 1)
    stg_acc[...] += jnp.sum(onehot, axis=-1, keepdims=True)        # (C, 1)

    @pl.when(k == pl.num_programs(1) - 1)
    def _():
        num = 2.0 * inter_acc[...] + SMOOTH
        den = sin_acc[...] + stg_acc[...] + SMOOTH
        dice_ref[0] = num / den                                     # (C, 1)


def dice_coeff(inputs: jnp.ndarray, targets: jnp.ndarray) -> jnp.ndarray:
    """Reproduces DiceCoeff.forward: returns a scalar.

    inputs : (N, C, H, W) float32, C in (2, 5)
    targets: (N, H, W)    int class indices in [0, C)
    """
    N, C, H, W = inputs.shape
    assert C in (2, 5)
    assert targets.shape == (N, H, W)
    HW = H * W

    # Lane-dense layout: flatten spatial dims so the last block dim is H*W.
    x = inputs.reshape(N, C, HW).astype(jnp.float32)
    t = targets.reshape(N, 1, HW).astype(jnp.int32)

    block_hw = _pick_block_hw(HW)
    num_k = HW // block_hw if HW % block_hw == 0 else 1
    if num_k == 1:
        block_hw = HW

    dice = pl.pallas_call(
        _dice_kernel,
        out_shape=jax.ShapeDtypeStruct((N, C, 1), jnp.float32),
        grid=(N, num_k),
        in_specs=[
            # inputs[n, :, k*block_hw : (k+1)*block_hw] -> kernel sees (C, BHW)
            pl.BlockSpec((pl.Squeezed(), C, block_hw), lambda n, k: (n, 0, k)),
            # targets[n, k-th tile] -> kernel sees (1, BHW)
            pl.BlockSpec((pl.Squeezed(), 1, block_hw), lambda n, k: (n, 0, k)),
        ],
        out_specs=pl.BlockSpec((1, C, 1), lambda n, k: (n, 0, 0)),
        scratch_shapes=[
            pltpu.VMEM((C, 1), jnp.float32),
            pltpu.VMEM((C, 1), jnp.float32),
            pltpu.VMEM((C, 1), jnp.float32),
        ],
        compiler_params=pltpu.CompilerParams(
            dimension_semantics=("parallel", "arbitrary")),
    )(x, t)

    # Tiny scalar math on N*C values stays in XLA:
    # total = sum_c (1 - mean_n dice_nc); total / C = 1 - mean_{n,c} dice.
    return 1.0 - jnp.mean(dice)


def _reference(inputs, targets):
    """Pure-JAX reference mirroring the PyTorch code exactly."""
    N, C, H, W = inputs.shape
    onehot = jax.nn.one_hot(targets, C, axis=1, dtype=inputs.dtype)  # (N,C,H,W)
    total = 0.0
    for c in range(C):
        i_flat = inputs[:, c].reshape(N, -1)
        t_flat = onehot[:, c].reshape(N, -1)
        inter = jnp.sum(i_flat * t_flat, axis=1)
        loss = (2 * inter + SMOOTH) / (i_flat.sum(axis=1) + t_flat.sum(axis=1) + SMOOTH)
        total = total + (1.0 - loss.mean())
    return total / C


if __name__ == "__main__":
    key = jax.random.PRNGKey(0)
    k1, k2 = jax.random.split(key)

    N, C, H, W = 2, 5, 16, 16
    inputs = jax.random.uniform(k1, (N, C, H, W), dtype=jnp.float32)
    targets = jax.random.randint(k2, (N, H, W), 0, C, dtype=jnp.int32)

    out = dice_coeff(inputs, targets)
    out = jax.block_until_ready(out)

    ref = _reference(inputs, targets)
    assert jnp.allclose(out, ref, atol=1e-5, rtol=1e-5), (out, ref)

    print("KERNEL_OK")
</pallas_src>

<mosaic_0001>
module attributes {stable_mosaic.version = 11 : i64} {
  func.func @_dice_kernel(%arg0: i32, %arg1: i32, %arg2: memref<1x5x256xf32, #tpu.memory_space<vmem>>, %arg3: memref<1x1x256xi32, #tpu.memory_space<vmem>>, %arg4: memref<1x5x1xf32, #tpu.memory_space<vmem>>, %arg5: memref<5x1xf32, #tpu.memory_space<vmem>>, %arg6: memref<5x1xf32, #tpu.memory_space<vmem>>, %arg7: memref<5x1xf32, #tpu.memory_space<vmem>>) attributes {dimension_semantics = [#tpu.dimension_semantics<parallel>, #tpu.dimension_semantics<arbitrary>], iteration_bounds = array<i64: 2, 1>, scalar_prefetch = 0 : i64, scratch_operands = 3 : i64, tpu.core_type = #tpu.core_type<tc>, window_params = [{transform_indices = @transform_0, window_bounds = array<i64: 1, 5, 256>}, {transform_indices = @transform_1, window_bounds = array<i64: 1, 1, 256>}, {transform_indices = @transform_2, window_bounds = array<i64: 1, 5, 1>}]} {
    %c0_i32 = arith.constant 0 : i32
    %0 = arith.cmpi eq, %arg1, %c0_i32 : i32
    %1 = arith.extui %0 : i1 to i32
    %c0_i32_0 = arith.constant 0 : i32
    %2 = arith.cmpi ne, %1, %c0_i32_0 : i32
    scf.if %2 {
      %cst_22 = arith.constant 0.000000e+00 : f32
      %31 = vector.broadcast %cst_22 : f32 to vector<5x1xf32>
      %c0_23 = arith.constant 0 : index
      %c0_24 = arith.constant 0 : index
      %32 = vector.load %arg5[%c0_23, %c0_24] : memref<5x1xf32, #tpu.memory_space<vmem>>, vector<5x1xf32>
      tpu.vector_store %arg5[%c0_23, %c0_24], %31 {strides = array<i32>} : memref<5x1xf32, #tpu.memory_space<vmem>>, vector<5x1xf32>,
      %cst_25 = arith.constant 0.000000e+00 : f32
      %33 = vector.broadcast %cst_25 : f32 to vector<5x1xf32>
      %c0_26 = arith.constant 0 : index
      %c0_27 = arith.constant 0 : index
      %34 = vector.load %arg6[%c0_26, %c0_27] : memref<5x1xf32, #tpu.memory_space<vmem>>, vector<5x1xf32>
      tpu.vector_store %arg6[%c0_26, %c0_27], %33 {strides = array<i32>} : memref<5x1xf32, #tpu.memory_space<vmem>>, vector<5x1xf32>,
      %cst_28 = arith.constant 0.000000e+00 : f32
      %35 = vector.broadcast %cst_28 : f32 to vector<5x1xf32>
      %c0_29 = arith.constant 0 : index
      %c0_30 = arith.constant 0 : index
      %36 = vector.load %arg7[%c0_29, %c0_30] : memref<5x1xf32, #tpu.memory_space<vmem>>, vector<5x1xf32>
      tpu.vector_store %arg7[%c0_29, %c0_30], %35 {strides = array<i32>} : memref<5x1xf32, #tpu.memory_space<vmem>>, vector<5x1xf32>,
    } else {
    }
    %c0 = arith.constant 0 : index
    %c0_1 = arith.constant 0 : index
    %c0_2 = arith.constant 0 : index
    %3 = vector.load %arg2[%c0, %c0_1, %c0_2] : memref<1x5x256xf32, #tpu.memory_space<vmem>>, vector<1x5x256xf32>
    %4 = vector.shape_cast %3 : vector<1x5x256xf32> to vector<5x256xf32>
    %c0_3 = arith.constant 0 : index
    %c0_4 = arith.constant 0 : index
    %c0_5 = arith.constant 0 : index
    %5 = vector.load %arg3[%c0_3, %c0_4, %c0_5] : memref<1x1x256xi32, #tpu.memory_space<vmem>>, vector<1x1x256xi32>
    %6 = vector.shape_cast %5 : vector<1x1x256xi32> to vector<1x256xi32>
    %7 = tpu.iota {dimensions = array<i32: 0>} : vector<5x256xi32>
    %8 = vector.broadcast %6 : vector<1x256xi32> to vector<5x256xi32>
    %9 = arith.cmpi eq, %8, %7 : vector<5x256xi32>
    %10 = arith.extui %9 : vector<5x256xi1> to vector<5x256xi32>
    %11 = arith.sitofp %10 : vector<5x256xi32> to vector<5x256xf32>
    %c0_6 = arith.constant 0 : index
    %c0_7 = arith.constant 0 : index
    %12 = vector.load %arg5[%c0_6, %c0_7] : memref<5x1xf32, #tpu.memory_space<vmem>>, vector<5x1xf32>
    %13 = arith.mulf %4, %11 : vector<5x256xf32>
    %cst = arith.constant dense<0.000000e+00> : vector<5xf32>
    %14 = vector.multi_reduction <add>, %13, %cst [1] : vector<5x256xf32> to vector<5xf32>
    %15 = vector.shape_cast %14 : vector<5xf32> to vector<5x1xf32>
    %16 = arith.addf %12, %15 : vector<5x1xf32>
    %c0_8 = arith.constant 0 : index
    %c0_9 = arith.constant 0 : index
    %17 = vector.load %arg5[%c0_8, %c0_9] : memref<5x1xf32, #tpu.memory_space<vmem>>, vector<5x1xf32>
    tpu.vector_store %arg5[%c0_8, %c0_9], %16 {strides = array<i32>} : memref<5x1xf32, #tpu.memory_space<vmem>>, vector<5x1xf32>,
    %c0_10 = arith.constant 0 : index
    %c0_11 = arith.constant 0 : index
    %18 = vector.load %arg6[%c0_10, %c0_11] : memref<5x1xf32, #tpu.memory_space<vmem>>, vector<5x1xf32>
    %cst_12 = arith.constant dense<0.000000e+00> : vector<5xf32>
    %19 = vector.multi_reduction <add>, %4, %cst_12 [1] : vector<5x256xf32> to vector<5xf32>
    %20 = vector.shape_cast %19 : vector<5xf32> to vector<5x1xf32>
    %21 = arith.addf %18, %20 : vector<5x1xf32>
    %c0_13 = arith.constant 0 : index
    %c0_14 = arith.constant 0 : index
    %22 = vector.load %arg6[%c0_13, %c0_14] : memref<5x1xf32, #tpu.memory_space<vmem>>, vector<5x1xf32>
    tpu.vector_store %arg6[%c0_13, %c0_14], %21 {strides = array<i32>} : memref<5x1xf32, #tpu.memory_space<vmem>>, vector<5x1xf32>,
    %c0_15 = arith.constant 0 : index
    %c0_16 = arith.constant 0 : index
    %23 = vector.load %arg7[%c0_15, %c0_16] : memref<5x1xf32, #tpu.memory_space<vmem>>, vector<5x1xf32>
    %cst_17 = arith.constant dense<0.000000e+00> : vector<5xf32>
    %24 = vector.multi_reduction <add>, %11, %cst_17 [1] : vector<5x256xf32> to vector<5xf32>
    %25 = vector.shape_cast %24 : vector<5xf32> to vector<5x1xf32>
    %26 = arith.addf %23, %25 : vector<5x1xf32>
    %c0_18 = arith.constant 0 : index
    %c0_19 = arith.constant 0 : index
    %27 = vector.load %arg7[%c0_18, %c0_19] : memref<5x1xf32, #tpu.memory_space<vmem>>, vector<5x1xf32>
    tpu.vector_store %arg7[%c0_18, %c0_19], %26 {strides = array<i32>} : memref<5x1xf32, #tpu.memory_space<vmem>>, vector<5x1xf32>,
    %c0_i32_20 = arith.constant 0 : i32
    %28 = arith.cmpi eq, %arg1, %c0_i32_20 : i32
    %29 = arith.extui %28 : i1 to i32
    %c0_i32_21 = arith.constant 0 : i32
    %30 = arith.cmpi ne, %29, %c0_i32_21 : i32
    scf.if %30 {
      %c0_22 = arith.constant 0 : index
      %c0_23 = arith.constant 0 : index
      %31 = vector.load %arg5[%c0_22, %c0_23] : memref<5x1xf32, #tpu.memory_space<vmem>>, vector<5x1xf32>
      %cst_24 = arith.constant 2.000000e+00 : f32
      %32 = vector.broadcast %cst_24 : f32 to vector<5x1xf32>
      %33 = arith.mulf %32, %31 : vector<5x1xf32>
      %cst_25 = arith.constant 1.000000e-03 : f32
      %34 = vector.broadcast %cst_25 : f32 to vector<5x1xf32>
      %35 = arith.addf %33, %34 : vector<5x1xf32>
      %c0_26 = arith.constant 0 : index
      %c0_27 = arith.constant 0 : index
      %36 = vector.load %arg6[%c0_26, %c0_27] : memref<5x1xf32, #tpu.memory_space<vmem>>, vector<5x1xf32>
      %c0_28 = arith.constant 0 : index
      %c0_29 = arith.constant 0 : index
      %37 = vector.load %arg7[%c0_28, %c0_29] : memref<5x1xf32, #tpu.memory_space<vmem>>, vector<5x1xf32>
      %38 = arith.addf %36, %37 : vector<5x1xf32>
      %cst_30 = arith.constant 1.000000e-03 : f32
      %39 = vector.broadcast %cst_30 : f32 to vector<5x1xf32>
      %40 = arith.addf %38, %39 : vector<5x1xf32>
      %41 = arith.divf %35, %40 : vector<5x1xf32>
      %c0_31 = arith.constant 0 : index
      %c0_32 = arith.constant 0 : index
      %c0_33 = arith.constant 0 : index
      %42 = vector.load %arg4[%c0_31, %c0_32, %c0_33] : memref<1x5x1xf32, #tpu.memory_space<vmem>>, vector<1x5x1xf32>
      %43 = vector.shape_cast %42 : vector<1x5x1xf32> to vector<5x1xf32>
      %44 = vector.shape_cast %41 : vector<5x1xf32> to vector<1x5x1xf32>
      tpu.vector_store %arg4[%c0_31, %c0_32, %c0_33], %44 {strides = array<i32>} : memref<1x5x1xf32, #tpu.memory_space<vmem>>, vector<1x5x1xf32>,
    } else {
    }
    return
  }
  func.func @transform_0(%arg0: i32, %arg1: i32) -> (i32, i32, i32) {
    %c0_i32 = arith.constant 0 : i32
    %c0_i32_0 = arith.constant 0 : i32
    return %arg0, %c0_i32, %arg1 : i32, i32, i32
  }
  func.func @transform_1(%arg0: i32, %arg1: i32) -> (i32, i32, i32) {
    %c0_i32 = arith.constant 0 : i32
    %c0_i32_0 = arith.constant 0 : i32
    return %arg0, %c0_i32, %arg1 : i32, i32, i32
  }
  func.func @transform_2(%arg0: i32, %arg1: i32) -> (i32, i32, i32) {
    %c0_i32 = arith.constant 0 : i32
    %c0_i32_0 = arith.constant 0 : i32
    %c0_i32_1 = arith.constant 0 : i32
    return %arg0, %c0_i32, %c0_i32_0 : i32, i32, i32
  }
}

</mosaic_0001>

<llo_original>
// kernel: tpu_custom_call.1
$region0: #{tpu_custom_call.1}
  #allocation0 [shape = 'u32[]', space=smem, size = 0x4, offset = 0x4, fixed_abs, tag = 'smem constant byte address 0x4 - core index']
  #allocation1 [shape = 'u32[144,128]{1,0:T(1,128)}', space=vmem, size = 0x12000, scoped, tag = 'internal scratch']
  #allocation2 [shape = 'f32[5,1]{1,0:T(8,128)}', space=vmem, size = 0x1000, scoped, tag = 'scratch operand']
  #allocation3 [shape = 'f32[5,1]{1,0:T(8,128)}', space=vmem, size = 0x1000, scoped, tag = 'scratch operand']
  #allocation4 [shape = 'f32[5,1]{1,0:T(8,128)}', space=vmem, size = 0x1000, scoped, tag = 'scratch operand']
  %s0 = inlined_call_operand.vmem [shape: f32[2,5,256], index: 0, kind: input, shape index: {}]
  %s1 = inlined_call_operand.vmem [shape: s32[2,1,256], index: 1, kind: input, shape index: {}]
  %s2 = inlined_call_operand.vmem [shape: f32[2,5,1], index: 2, kind: output, shape index: {}]
  %s3 = sld [smem:[#allocation0]]
  $region49: #{tpu_custom_call.1} parent=0
    _
  %s5 = ssub.s32 1, %s3
  %s6 = scalar_select 0, %s5, %s3
  loop: start=0, step=1, limit=4
  $region2: #{tpu_custom_call.1} parent=0 // loop_pre_header
    _
  $region3: #{tpu_custom_call.1} parent=0 // loop_header
    %s8 = sphi 0, %s12
    %p9 = scmp.ge.s32.totalorder %s8, 4
    %s15 = sphi 0, %s27
    %s16 = sphi 0, %s23
    %s17 = sphi 0, %s15
    %s18 = sphi 0, %s16
    %s19 = sphi 0, %s17
    %s20 = sphi 0, %s18
    %s32 = sphi 0, %s34
    %s35 = sphi 0, %s32
    %s36 = sphi 0, %s35
    %s52 = sphi 0, %s36
    %s60 = sphi 0, %s62
    %s63 = sphi 0, %s60
    %s64 = sphi 0, %s63
    %s80 = sphi 0, %s64
    %s86 = sphi 0, %s88
    %s89 = sphi 0, %s86
    %s90 = sphi 0, %s89
    %s106 = sphi 0, %s90
  $region4: #{tpu_custom_call.1} parent=0 // loop_header_branch
    %11 = sbr.rel (%p9) target = $region8
  $region5: #{tpu_custom_call.1} parent=0 // loop_body
    %s13 = ssub.s32 %s8, 1
    %s14 = ssub.s32 %s8, 2
    %s21 = sadd.s32 1, %s16
    %p22 = scmp.ge.s32.totalorder %s21, 1
    %s23 = scalar_select %p22, 0, %s21
    %s24 = sadd.s32 1, %s15
    %s25 = scalar_select %p22, %s24, %s15
    %p26 = scmp.ge.s32.totalorder %s25, 2
    %s27 = scalar_select %p26, 0, %s25
    %s28 = ssub.s32 %s15, %s27
    %s29 = ssub.s32 %s16, %s23
    %s30 = sor.u32 %s28, %s29
    %p31 = scmp.eq.s32.totalorder %s30, 0
    %s33 = sadd.s32 %s32, 1
    %s34 = scalar_select %p31, %s32, %s33
    %p37 = pneg %p31
    %p38 = scmp.eq.s32.totalorder %s8, 1
    %p39 = por %p37, %p38
    %p40 = scmp.ne.s32.totalorder %s32, %s35
    %p41 = scmp.eq.s32.totalorder %s8, 0
    %p42 = por %p40, %p41
    %p43 = scmp.ne.s32.totalorder %s32, %s35
    %p44 = scmp.eq.s32.totalorder %s13, 1
    %p45 = por %p43, %p44
    %p46 = scmp.ne.s32.totalorder %s35, %s36
    %p47 = scmp.eq.s32.totalorder %s13, 0
    %p48 = por %p46, %p47
    %p49 = scmp.ne.s32.totalorder %s35, %s36
    %p50 = scmp.eq.s32.totalorder %s14, 1
    %p51 = por %p49, %p50
    %p53 = scmp.ne.s32.totalorder %s36, %s52
    %p54 = scmp.eq.s32.totalorder %s14, 0
    %p55 = por %p53, %p54
    %s56 = ssub.s32 %s15, %s27
    %s57 = ssub.s32 %s16, %s23
    %s58 = sor.u32 %s56, %s57
    %p59 = scmp.eq.s32.totalorder %s58, 0
    %s61 = sadd.s32 %s60, 1
    %s62 = scalar_select %p59, %s60, %s61
    %p65 = pneg %p59
    %p66 = scmp.eq.s32.totalorder %s8, 1
    %p67 = por %p65, %p66
    %p68 = scmp.ne.s32.totalorder %s60, %s63
    %p69 = scmp.eq.s32.totalorder %s8, 0
    %p70 = por %p68, %p69
    %p71 = scmp.ne.s32.totalorder %s60, %s63
    %p72 = scmp.eq.s32.totalorder %s13, 1
    %p73 = por %p71, %p72
    %p74 = scmp.ne.s32.totalorder %s63, %s64
    %p75 = scmp.eq.s32.totalorder %s13, 0
    %p76 = por %p74, %p75
    %p77 = scmp.ne.s32.totalorder %s63, %s64
    %p78 = scmp.eq.s32.totalorder %s14, 1
    %p79 = por %p77, %p78
    %p81 = scmp.ne.s32.totalorder %s64, %s80
    %p82 = scmp.eq.s32.totalorder %s14, 0
    %p83 = por %p81, %p82
    %s84 = ssub.s32 %s15, %s27
    %p85 = scmp.eq.s32.totalorder %s84, 0
    %s87 = sadd.s32 %s86, 1
    %s88 = scalar_select %p85, %s86, %s87
    %p91 = pneg %p85
    %p92 = scmp.eq.s32.totalorder %s8, 1
    %p93 = por %p91, %p92
    %p94 = scmp.ne.s32.totalorder %s86, %s89
    %p95 = scmp.eq.s32.totalorder %s8, 0
    %p96 = por %p94, %p95
    %p97 = scmp.ne.s32.totalorder %s86, %s89
    %p98 = scmp.eq.s32.totalorder %s13, 1
    %p99 = por %p97, %p98
    %p100 = scmp.ne.s32.totalorder %s89, %s90
    %p101 = scmp.eq.s32.totalorder %s13, 0
    %p102 = por %p100, %p101
    %p103 = scmp.ne.s32.totalorder %s89, %s90
    %p104 = scmp.eq.s32.totalorder %s14, 1
    %p105 = por %p103, %p104
    %p107 = scmp.ne.s32.totalorder %s90, %s106
    %p108 = scmp.eq.s32.totalorder %s14, 0
    %p109 = por %p107, %p108
    %p110 = scmp.le.s32.totalorder 1, %s8
    %p111 = scmp.lt.s32.totalorder %s8, 3
    %p112 = pnand %p110, %p111
    %p113 = pneg %p112
    // Predicated region
    $region9: #{tpu_custom_call.1} parent=5 // pred_check
      _
    $region10: #{tpu_custom_call.1} parent=5 // pred_check_branch
      %115 = sbr.rel (%p112) target = $region12
    $region11: #{tpu_custom_call.1} parent=5 // pred_region
      %s116 = ssub.s32 %s8, 1
    $region12: #{tpu_custom_call.1} parent=5 // pred_fallthru
      _
    %p117 = scmp.lt.s32.totalorder %s8, 2
    // Predicated region
    $region13: #{tpu_custom_call.1} parent=5 // pred_check
      %p118 = pneg %p117
    $region14: #{tpu_custom_call.1} parent=5 // pred_check_branch
      %120 = sbr.rel (%p118) target = $region16
    $region15: #{tpu_custom_call.1} parent=5 // pred_region
      // Predicated region
      $region17: #{tpu_custom_call.1} parent=15 // pred_check
        %p121 = pneg %p42
      $region18: #{tpu_custom_call.1} parent=15 // pred_check_branch
        %123 = sbr.rel (%p121) target = $region20
      $region19: #{tpu_custom_call.1} parent=15 // pred_region
        %s124 = smul.u32 2, %s16
        %p125 = scmp.lt.s32.totalorder %s15, 1
        %s126 = scalar_select %p125, %s15, 1
        %p127 = scmp.lt.s32.totalorder %s124, 1
        %s128 = scalar_select %p127, %s124, 1
        %s129 = smul.addr %s126, 2
        %s130 = sadd.s32 %s128, %s129
        %s131 = smul.addr %s130, 8
        %s132 = scalar_lea.vmem %s0, %s131
        %s133 = smul.u32 2, %s16
      $region20: #{tpu_custom_call.1} parent=15 // pred_fallthru
        _
      // Predicated region
      $region21: #{tpu_custom_call.1} parent=15 // pred_check
        %p134 = pneg %p70
      $region22: #{tpu_custom_call.1} parent=15 // pred_check_branch
        %136 = sbr.rel (%p134) target = $region24
      $region23: #{tpu_custom_call.1} parent=15 // pred_region
        %s137 = smul.u32 2, %s16
        %p138 = scmp.lt.s32.totalorder %s15, 1
        %s139 = scalar_select %p138, %s15, 1
        %p140 = scmp.lt.s32.totalorder %s137, 1
        %s141 = scalar_select %p140, %s137, 1
        %s142 = smul.addr %s139, 2
        %s143 = sadd.s32 %s141, %s142
        %s144 = scalar_lea.vmem %s1, %s143
        %s145 = smul.u32 2, %s16
      $region24: #{tpu_custom_call.1} parent=15 // pred_fallthru
        _
    $region16: #{tpu_custom_call.1} parent=5 // pred_fallthru
      _
    %p146 = scmp.le.s32.totalorder 1, %s8
    %p147 = scmp.lt.s32.totalorder %s8, 3
    %p148 = pnand %p146, %p147
    %p149 = pneg %p148
    // Predicated region
    $region25: #{tpu_custom_call.1} parent=5 // pred_check
      _
    $region26: #{tpu_custom_call.1} parent=5 // pred_check_branch
      %151 = sbr.rel (%p148) target = $region28
    $region27: #{tpu_custom_call.1} parent=5 // pred_region
      %s152 = ssub.s32 %s8, 1
      %s153 = smul.u32 2, %s18
      %p154 = scmp.lt.s32.totalorder %s17, 1
      %s155 = scalar_select %p154, %s17, 1
      %p156 = scmp.lt.s32.totalorder %s153, 1
      %s157 = scalar_select %p156, %s153, 1
      %s158 = smul.addr %s155, 2
      %s159 = sadd.s32 %s157, %s158
      %s160 = smul.addr %s159, 8
      %s161 = scalar_lea.vmem %s0, %s160
      %p162 = pneg %p48
      %p163 = pneg %p45
      %s164 = smul.u32 2, %s18
      %p165 = scmp.lt.s32.totalorder %s17, 1
      %s166 = scalar_select %p165, %s17, 1
      %p167 = scmp.lt.s32.totalorder %s164, 1
      %s168 = scalar_select %p167, %s164, 1
      %s169 = smul.addr %s166, 2
      %s170 = sadd.s32 %s168, %s169
      %s171 = scalar_lea.vmem %s1, %s170
      %p172 = pneg %p76
      %p173 = pneg %p73
      %p174 = pneg %p102
      %p175 = pneg %p99
      %p176 = scmp.lt.s32.totalorder %s17, 1
      %s177 = scalar_select %p176, %s17, 1
      %s178 = smul.addr %s177, 8
      %s179 = scalar_lea.vmem %s2, %s178
      %s180 = smul.u32 2, %s18
      %p181 = scmp.lt.s32.totalorder %s17, 1
      %s182 = scalar_select %p181, %s17, 1
      %p183 = scmp.lt.s32.totalorder %s180, 1
      %s184 = scalar_select %p183, %s180, 1
      %s185 = smul.addr %s182, 2
      %s186 = sadd.s32 %s184, %s185
      %s187 = smul.addr %s186, 8
      %s188 = scalar_lea.vmem %s0, %s187
      %s189 = smul.u32 2, %s18
      %s190 = smul.u32 2, %s18
      %p191 = scmp.lt.s32.totalorder %s17, 1
      %s192 = scalar_select %p191, %s17, 1
      %p193 = scmp.lt.s32.totalorder %s190, 1
      %s194 = scalar_select %p193, %s190, 1
      %s195 = smul.addr %s192, 2
      %s196 = sadd.s32 %s194, %s195
      %s197 = scalar_lea.vmem %s1, %s196
      %s198 = smul.u32 2, %s18
      %p199 = scmp.lt.s32.totalorder %s17, 1
      %s200 = scalar_select %p199, %s17, 1
      %s201 = smul.addr %s200, 8
      %s202 = scalar_lea.vmem %s2, %s201
      %p203 = scmp.eq.s32.totalorder %s18, 0
      // Predicated region
      $region29: #{tpu_custom_call.1} parent=27 // pred_check
        %p204 = pneg %p203
      $region30: #{tpu_custom_call.1} parent=27 // pred_check_branch
        %206 = sbr.rel (%p204) target = $region32
      $region31: #{tpu_custom_call.1} parent=27 // pred_region
        %vm207 = vcmask 4096
        %208 = vst.msk [vmem:[#allocation2] sm:$0x1f] %vm207, 0.0
        %209 = vst.msk [vmem:[#allocation3] sm:$0x1f] %vm207, 0.0
        %210 = vst.msk [vmem:[#allocation4] sm:$0x1f] %vm207, 0.0
      $region32: #{tpu_custom_call.1} parent=27 // pred_fallthru
        _
      %v211 = vld [vmem:[%s188] sm:$0x1f]
      %v212 = vld [vmem:[%s188 + $0x8] sm:$0x1f]
      %v213 = vld [vmem:[%s197] sm:$0x3]
      %v214 = vlaneseq
      %v215 = vshrl.u32 %v214, 7
      %v216 = vlaneseq
      %v217 = vshrl.u32 %v216, 7
      %v218 = vsub.s32 0, %v217
      %v219 = vrot.slane %v213, %v218
      %v220 = vlaneseq
      %v221 = vshrl.u32 %v220, 7
      %v222 = vsub.s32 1, %v221
      %v223 = vrot.slane %v213, %v222
      %vm224 = vcmp.eq.s32.totalorder %v219, %v215
      %vm225 = vcmp.eq.s32.totalorder %v223, %v215
      %v226 = vsel %vm224, 1, 0
      %v227 = vsel %vm225, 1, 0
      %v228 = vcvt.s32.f32 %v226
      %v229 = vcvt.s32.f32 %v227
      %v230 = vld [vmem:[#allocation2] sm:$0x1f]
      %v231 = vmul.f32 %v211, %v228
      %v232 = vmul.f32 %v212, %v229
      %vm233 = vcmask 1044480
      %v234 = vsel %vm233, %v231, 0.0
      %v235 = vsel %vm233, %v232, 0.0
      %v236 = vadd.f32 %v234, %v235
      %237 = vadd.xlane.f32.xlu0 %v236
      %v238 = vpop.xlane.xlu0 %237
      %v239 = vadd.f32 %v230, %v238
      %vm240 = vcmask 4096
      %241 = vst.msk [vmem:[#allocation2] sm:$0x1f] %vm240, %v239
      %v242 = vld [vmem:[#allocation3] sm:$0x1f]
      %v243 = vsel %vm233, %v211, 0.0
      %v244 = vsel %vm233, %v212, 0.0
      %v245 = vadd.f32 %v243, %v244
      %246 = vadd.xlane.f32.xlu0 %v245
      %v247 = vpop.xlane.xlu0 %246
      %v248 = vadd.f32 %v242, %v247
      %249 = vst.msk [vmem:[#allocation3] sm:$0x1f] %vm240, %v248
      %v250 = vld [vmem:[#allocation4] sm:$0x1f]
      %v251 = vsel %vm233, %v228, 0.0
      %v252 = vsel %vm233, %v229, 0.0
      %v253 = vadd.f32 %v251, %v252
      %254 = vadd.xlane.f32.xlu0 %v253
      %v255 = vpop.xlane.xlu0 %254
      %v256 = vadd.f32 %v250, %v255
      %257 = vst.msk [vmem:[#allocation4] sm:$0x1f] %vm240, %v256
      // Predicated region
      $region33: #{tpu_custom_call.1} parent=27 // pred_check
        %p258 = pneg %p203
      $region34: #{tpu_custom_call.1} parent=27 // pred_check_branch
        %260 = sbr.rel (%p258) target = $region36
      $region35: #{tpu_custom_call.1} parent=27 // pred_region
        %v261 = vld [vmem:[#allocation2] sm:$0x1f]
        %v262 = vmul.f32 %v261, 2.0
        %v263 = vadd.f32 %v262, 0.001
        %v264 = vld [vmem:[#allocation3] sm:$0x1f]
        %v265 = vld [vmem:[#allocation4] sm:$0x1f]
        %v266 = vadd.f32 %v264, %v265
        %v267 = vadd.f32 %v266, 0.001
        %v268 = vrcp.pop %v267
        %v269 = vmul.f32 %v263, %v268
        %270 = vst.msk [vmem:[%s202] sm:$0x1f] %vm240, %v269
      $region36: #{tpu_custom_call.1} parent=27 // pred_fallthru
        _
      %p271 = scmp.lt.s32.totalorder %s17, 1
      %s272 = scalar_select %p271, %s17, 1
      %s273 = smul.addr %s272, 8
      %s274 = scalar_lea.vmem %s2, %s273
      // Predicated region
      $region37: #{tpu_custom_call.1} parent=27 // pred_check
        %p275 = pneg %p99
      $region38: #{tpu_custom_call.1} parent=27 // pred_check_branch
        %277 = sbr.rel (%p275) target = $region40
      $region39: #{tpu_custom_call.1} parent=27 // pred_region
        _
      $region40: #{tpu_custom_call.1} parent=27 // pred_fallthru
        _
    $region28: #{tpu_custom_call.1} parent=5 // pred_fallthru
      _
    %p278 = scmp.le.s32.totalorder 2, %s8
    // Predicated region
    $region41: #{tpu_custom_call.1} parent=5 // pred_check
      %p279 = pneg %p278
    $region42: #{tpu_custom_call.1} parent=5 // pred_check_branch
      %281 = sbr.rel (%p279) target = $region44
    $region43: #{tpu_custom_call.1} parent=5 // pred_region
      %s282 = ssub.s32 %s8, 2
      // Predicated region
      $region45: #{tpu_custom_call.1} parent=43 // pred_check
        %p283 = pneg %p105
      $region46: #{tpu_custom_call.1} parent=43 // pred_check_branch
        %285 = sbr.rel (%p283) target = $region48
      $region47: #{tpu_custom_call.1} parent=43 // pred_region
        %p286 = scmp.lt.s32.totalorder %s19, 1
        %s287 = scalar_select %p286, %s19, 1
        %s288 = smul.addr %s287, 8
        %s289 = scalar_lea.vmem %s2, %s288
      $region48: #{tpu_custom_call.1} parent=43 // pred_fallthru
        _
    $region44: #{tpu_custom_call.1} parent=5 // pred_fallthru
      _
  $region6: #{tpu_custom_call.1} parent=0 // loop_footer
    %s12 = sadd.s32 1, %s8
  $region7: #{tpu_custom_call.1} parent=0 // loop_footer_branch
    %7 = sbr.rel target = $region3
  $region8: #{tpu_custom_call.1} parent=0 // loop_exit
    _

</llo_original>
